<compile_context>
chip_gen: v5e
topology: v5e:2x2
jax: 0.10.0
libtpu: 0.0.40
codegen_flags: <defaults>
</compile_context>

<pallas_src>
import functools

import jax
import jax.numpy as jnp
from jax.experimental import pallas as pl
from jax.experimental.pallas import tpu as pltpu


def _lm_criterion_kernel(inp_ref, tgt_ref, out_ref, acc_ref, *,
                         n_rows, tm, tv, acc_rows, needs_row_mask):
    i = pl.program_id(0)      # row-block index   ("parallel")
    j = pl.program_id(1)      # vocab-block index ("arbitrary", innermost)

    @pl.when(j == 0)
    def _():
        acc_ref[...] = jnp.zeros_like(acc_ref)

    logp = inp_ref[...].astype(jnp.float32)      # (tm, tv); per-tile cast, f32 accumulation
    tgt = tgt_ref[...]                           # (tm, 1) int32

    # Fold the padding mask (target > 0), the (optional) valid-row mask and the
    # vocab-block offset into the target once per row ((tm, 1) VPU work), so
    # per-element work is just compare + select + add.
    valid = tgt > 0
    if needs_row_mask:
        row_ids = jax.lax.broadcasted_iota(jnp.int32, (tm, 1), 0) + i * tm
        valid = valid & (row_ids < n_rows)
    tgt_eff = jnp.where(valid, tgt - j * tv, jnp.int32(-1))        # (tm, 1)

    lane_ids = jax.lax.broadcasted_iota(jnp.int32, (tm, tv), 1)    # local vocab ids
    sel = jnp.where(lane_ids == tgt_eff, logp, jnp.float32(0.0))   # (tm, tv)

    # Accumulate whole vregs (plain VPU adds); defer the cross-sublane /
    # cross-lane reduce to the final vocab step.
    if acc_rows == 1:
        acc_ref[...] += jnp.sum(sel, axis=0, keepdims=True)
    else:
        acc_ref[...] += jnp.sum(sel.reshape(tm // acc_rows, acc_rows, tv), axis=0)

    # One full reduce per row block, written lane-dense -> unmasked vst.
    @pl.when(j == pl.num_programs(1) - 1)
    def _():
        out_ref[...] = jnp.full((8, 128), jnp.sum(acc_ref[...]), dtype=jnp.float32)


def _vmem_capacity_bytes() -> int:
    """Best-effort VMEM capacity query (falls back to smallest per-TC size)."""
    try:
        info = pltpu.get_tpu_info()
        cap = int(getattr(info, "vmem_capacity_bytes", 0) or 0)
        if cap > 0:
            return cap
    except Exception:
        pass
    return 64 * 1024 * 1024   # conservative: v7x has 64 MiB per TensorCore


def lm_criterion(logprobs: jax.Array, target: jax.Array) -> jax.Array:
    """Pallas LMCriterion.

    logprobs: (N, V) float (bf16 / f16 / f32; streamed in its native dtype)
    target:   (N, 1) int; token id 0 is padding (masked out)
    returns:  scalar f32 = -sum_n logprobs[n, target[n]] over target[n] > 0

    Precondition (as in the torch module): 0 <= target[n] < V.
    """
    N, V = logprobs.shape
    if logprobs.dtype not in (jnp.dtype(jnp.float32), jnp.dtype(jnp.bfloat16),
                              jnp.dtype(jnp.float16)):
        logprobs = logprobs.astype(jnp.float32)
    target = target.reshape(N, 1).astype(jnp.int32)
    elem = jnp.dtype(logprobs.dtype).itemsize

    # --- vocab tile: whole vocab if modest, else a 128-multiple block ---------
    MAX_TV = 2048
    tv = V if V <= MAX_TV else MAX_TV

    # --- generation-aware VMEM budget (v7x: 64 MiB / TC, both TCs active) -----
    small_vmem = _vmem_capacity_bytes() <= (64 << 20)
    input_budget = (16 << 20) if small_vmem else (20 << 20)
    vmem_cap = (32 << 20) if small_vmem else (48 << 20)

    # --- row tile: largest multiple of 8 whose 2 double-buffered input tiles
    #     fit the byte budget (bf16 inputs -> 2x the rows for the same bytes) --
    tm = input_budget // (2 * tv * elem)
    tm = max(8, (tm // 8) * 8)
    tm = min(tm, 4096)
    # Guarantee >= 2 row blocks when N allows it so the "parallel" row axis can
    # be sharded across both TensorCores on dual-TC chips (v7x). No effect on
    # single-TC chips beyond a slightly smaller (still large) tile.
    if N >= 16:
        half = ((pl.cdiv(N, 2) + 7) // 8) * 8
        tm = min(tm, half)
    if tm >= N:
        tm = N

    needs_row_mask = (N % tm) != 0
    acc_rows = 8 if (tm % 8 == 0) else 1
    g_rows = pl.cdiv(N, tm)
    g_vocab = pl.cdiv(V, tv)

    # Explicit VMEM limit: double-buffered inputs + lane-padded target tiles +
    # accumulator + output blocks + slack, clamped to the per-generation cap.
    vmem_need = (2 * tm * tv * elem            # logprob tiles (double-buffered)
                 + 2 * tm * 128 * 4            # target tiles (lane-padded)
                 + 8 * max(tv, 128) * 4        # accumulator
                 + 2 * 8 * 128 * 4             # output blocks
                 + (4 << 20))                  # slack
    vmem_limit = int(min(max(vmem_need, 16 << 20), vmem_cap))

    kernel = functools.partial(
        _lm_criterion_kernel,
        n_rows=N, tm=tm, tv=tv, acc_rows=acc_rows, needs_row_mask=needs_row_mask)

    partials = pl.pallas_call(
        kernel,
        out_shape=jax.ShapeDtypeStruct((g_rows * 8, 128), jnp.float32),
        grid_spec=pltpu.PrefetchScalarGridSpec(
            num_scalar_prefetch=0,
            grid=(g_rows, g_vocab),
            in_specs=[
                pl.BlockSpec((tm, tv), lambda i, j: (i, j)),  # logprob tile (native dtype)
                pl.BlockSpec((tm, 1), lambda i, j: (i, 0)),   # target rows (reused across j)
            ],
            out_specs=pl.BlockSpec((8, 128), lambda i, j: (i, 0)),
            scratch_shapes=[pltpu.VMEM((acc_rows, tv), jnp.float32)],
        ),
        compiler_params=pltpu.CompilerParams(
            dimension_semantics=("parallel", "arbitrary"),
            vmem_limit_bytes=vmem_limit,
        ),
    )(logprobs, target)

    # Tiny final reduction + negation in plain JAX (one value per row block).
    per_block = partials.reshape(g_rows, 8, 128)[:, 0, 0]
    return -jnp.sum(per_block)


if __name__ == "__main__":
    key = jax.random.PRNGKey(0)
    k1, k2, k3, k4 = jax.random.split(key, 4)

    # ---- Test 1: small shapes (batch=2, seq=8 -> N=16 rows, vocab V=32), f32.
    #      Exercises g_rows > 1 (parallel row axis) with a single vocab block.
    N, V = 16, 32
    logits = jax.random.normal(k1, (N, V), dtype=jnp.float32)
    logprobs = jax.nn.log_softmax(logits, axis=-1)
    target = jax.random.randint(k2, (N, 1), 0, V, dtype=jnp.int32)
    target = target.at[0, 0].set(0).at[5, 0].set(0)      # padding rows

    loss = jax.block_until_ready(lm_criterion(logprobs, target))

    gathered = jnp.take_along_axis(logprobs, target, axis=1)
    loss_ref = -jnp.sum(jnp.where(target > 0, gathered, 0.0))
    assert jnp.allclose(loss, loss_ref, rtol=1e-5, atol=1e-4), (loss, loss_ref)

    # ---- Test 2: bf16 streaming + multi-block paths (g_rows > 1, g_vocab > 1,
    #      partial last row block and partial last vocab block).
    N2, V2 = 20, 2176
    logits2 = jax.random.normal(k3, (N2, V2), dtype=jnp.float32)
    logprobs2 = jax.nn.log_softmax(logits2, axis=-1).astype(jnp.bfloat16)
    target2 = jax.random.randint(k4, (N2, 1), 0, V2, dtype=jnp.int32)
    target2 = target2.at[3, 0].set(0).at[17, 0].set(0)   # padding rows

    loss2 = jax.block_until_ready(lm_criterion(logprobs2, target2))

    gathered2 = jnp.take_along_axis(logprobs2, target2, axis=1).astype(jnp.float32)
    loss2_ref = -jnp.sum(jnp.where(target2 > 0, gathered2, 0.0))
    assert jnp.allclose(loss2, loss2_ref, rtol=1e-5, atol=1e-3), (loss2, loss2_ref)

    print("KERNEL_OK")
</pallas_src>

<mosaic_0001>
module attributes {stable_mosaic.version = 11 : i64} {
  func.func @_lm_criterion_kernel(%arg0: i32, %arg1: i32, %arg2: memref<8x32xf32, #tpu.memory_space<vmem>>, %arg3: memref<8x1xi32, #tpu.memory_space<vmem>>, %arg4: memref<8x128xf32, #tpu.memory_space<vmem>>, %arg5: memref<8x32xf32, #tpu.memory_space<vmem>>) attributes {dimension_semantics = [#tpu.dimension_semantics<parallel>, #tpu.dimension_semantics<arbitrary>], iteration_bounds = array<i64: 2, 1>, scalar_prefetch = 0 : i64, scratch_operands = 1 : i64, tpu.core_type = #tpu.core_type<tc>, window_params = [{transform_indices = @transform_0, window_bounds = array<i64: 8, 32>}, {transform_indices = @transform_1, window_bounds = array<i64: 8, 1>}, {transform_indices = @transform_2, window_bounds = array<i64: 8, 128>}]} {
    %c0_i32 = arith.constant 0 : i32
    %0 = arith.cmpi eq, %arg1, %c0_i32 : i32
    %1 = arith.extui %0 : i1 to i32
    %c0_i32_0 = arith.constant 0 : i32
    %2 = arith.cmpi ne, %1, %c0_i32_0 : i32
    scf.if %2 {
      %cst_12 = arith.constant 0.000000e+00 : f32
      %25 = vector.broadcast %cst_12 : f32 to vector<8x32xf32>
      %c0_13 = arith.constant 0 : index
      %c0_14 = arith.constant 0 : index
      %26 = vector.load %arg5[%c0_13, %c0_14] : memref<8x32xf32, #tpu.memory_space<vmem>>, vector<8x32xf32>
      tpu.vector_store %arg5[%c0_13, %c0_14], %25 {strides = array<i32>} : memref<8x32xf32, #tpu.memory_space<vmem>>, vector<8x32xf32>,
    } else {
    }
    %c0 = arith.constant 0 : index
    %c0_1 = arith.constant 0 : index
    %3 = vector.load %arg2[%c0, %c0_1] : memref<8x32xf32, #tpu.memory_space<vmem>>, vector<8x32xf32>
    %c0_2 = arith.constant 0 : index
    %c0_3 = arith.constant 0 : index
    %4 = vector.load %arg3[%c0_2, %c0_3] : memref<8x1xi32, #tpu.memory_space<vmem>>, vector<8x1xi32>
    %c0_i32_4 = arith.constant 0 : i32
    %5 = vector.broadcast %c0_i32_4 : i32 to vector<8x1xi32>
    %6 = arith.cmpi sgt, %4, %5 : vector<8x1xi32>
    %c32_i32 = arith.constant 32 : i32
    %7 = arith.muli %arg1, %c32_i32 : i32
    %8 = vector.broadcast %7 : i32 to vector<8x1xi32>
    %9 = arith.subi %4, %8 : vector<8x1xi32>
    %c-1_i32 = arith.constant -1 : i32
    %10 = vector.broadcast %c-1_i32 : i32 to vector<8x1xi32>
    %11 = arith.select %6, %9, %10 : vector<8x1xi1>, vector<8x1xi32>
    %12 = tpu.iota {dimensions = array<i32: 1>} : vector<8x32xi32>
    %13 = vector.broadcast %11 : vector<8x1xi32> to vector<8x32xi32>
    %14 = arith.cmpi eq, %12, %13 : vector<8x32xi32>
    %cst = arith.constant 0.000000e+00 : f32
    %15 = vector.broadcast %cst : f32 to vector<8x32xf32>
    %16 = arith.select %14, %3, %15 : vector<8x32xi1>, vector<8x32xf32>
    %c0_5 = arith.constant 0 : index
    %c0_6 = arith.constant 0 : index
    %17 = vector.load %arg5[%c0_5, %c0_6] : memref<8x32xf32, #tpu.memory_space<vmem>>, vector<8x32xf32>
    %18 = vector.shape_cast %16 : vector<8x32xf32> to vector<1x8x32xf32>
    %cst_7 = arith.constant dense<0.000000e+00> : vector<8x32xf32>
    %19 = vector.multi_reduction <add>, %18, %cst_7 [0] : vector<1x8x32xf32> to vector<8x32xf32>
    %20 = arith.addf %17, %19 : vector<8x32xf32>
    %c0_8 = arith.constant 0 : index
    %c0_9 = arith.constant 0 : index
    %21 = vector.load %arg5[%c0_8, %c0_9] : memref<8x32xf32, #tpu.memory_space<vmem>>, vector<8x32xf32>
    tpu.vector_store %arg5[%c0_8, %c0_9], %20 {strides = array<i32>} : memref<8x32xf32, #tpu.memory_space<vmem>>, vector<8x32xf32>,
    %c0_i32_10 = arith.constant 0 : i32
    %22 = arith.cmpi eq, %arg1, %c0_i32_10 : i32
    %23 = arith.extui %22 : i1 to i32
    %c0_i32_11 = arith.constant 0 : i32
    %24 = arith.cmpi ne, %23, %c0_i32_11 : i32
    scf.if %24 {
      %c0_12 = arith.constant 0 : index
      %c0_13 = arith.constant 0 : index
      %25 = vector.load %arg5[%c0_12, %c0_13] : memref<8x32xf32, #tpu.memory_space<vmem>>, vector<8x32xf32>
      %26 = vector.shape_cast %25 : vector<8x32xf32> to vector<1x8x32xf32>
      %cst_14 = arith.constant dense<0.000000e+00> : vector<1xf32>
      %27 = vector.multi_reduction <add>, %26, %cst_14 [1, 2] : vector<1x8x32xf32> to vector<1xf32>
      %28 = vector.shape_cast %27 : vector<1xf32> to vector<1x1x1xf32>
      %29 = vector.extract %28[0, 0, 0] : f32 from vector<1x1x1xf32>
      %30 = vector.broadcast %29 : f32 to vector<8x128xf32>
      %c0_15 = arith.constant 0 : index
      %c0_16 = arith.constant 0 : index
      %31 = vector.load %arg4[%c0_15, %c0_16] : memref<8x128xf32, #tpu.memory_space<vmem>>, vector<8x128xf32>
      tpu.vector_store %arg4[%c0_15, %c0_16], %30 {strides = array<i32>} : memref<8x128xf32, #tpu.memory_space<vmem>>, vector<8x128xf32>,
    } else {
    }
    return
  }
  func.func @transform_0(%arg0: i32, %arg1: i32) -> (i32, i32) {
    %c0_i32 = arith.constant 0 : i32
    return %arg0, %arg1 : i32, i32
  }
  func.func @transform_1(%arg0: i32, %arg1: i32) -> (i32, i32) {
    %c0_i32 = arith.constant 0 : i32
    %c0_i32_0 = arith.constant 0 : i32
    return %arg0, %c0_i32 : i32, i32
  }
  func.func @transform_2(%arg0: i32, %arg1: i32) -> (i32, i32) {
    %c0_i32 = arith.constant 0 : i32
    %c0_i32_0 = arith.constant 0 : i32
    return %arg0, %c0_i32 : i32, i32
  }
}

</mosaic_0001>

<llo_original>
// kernel: tpu_custom_call.1
$region0: #{tpu_custom_call.1}
  #allocation0 [shape = 'u32[]', space=smem, size = 0x4, offset = 0x4, fixed_abs, tag = 'smem constant byte address 0x4 - core index']
  #allocation1 [shape = 'u32[72,128]{1,0:T(1,128)}', space=vmem, size = 0x9000, scoped, tag = 'internal scratch']
  #allocation2 [shape = 'f32[8,32]{1,0:T(8,128)}', space=vmem, size = 0x1000, scoped, tag = 'scratch operand']
  %s0 = inlined_call_operand.vmem [shape: f32[16,32], index: 0, kind: input, shape index: {}]
  %s1 = inlined_call_operand.vmem [shape: s32[16,1], index: 1, kind: input, shape index: {}]
  %s2 = inlined_call_operand.hbm [shape: f32[16,128], index: 2, kind: output, shape index: {}]
  %s3 = sld [smem:[#allocation0]]
  $region49: #{tpu_custom_call.1} parent=0
    _
  %s5 = ssub.s32 1, %s3
  %s6 = scalar_select 0, %s5, %s3
  $region1: #{tpu_custom_call.1} parent=0
    #allocation3 [shape = 'u8[8192]{0}', space=vmem, size = 0x2000, scoped, tag = 'output window, operand 0']
    #allocation4 [shape = 's32[2]{0}', space=sflag, size = 0x8, scoped, tag = 'scoped memory for tpu_custom_call.1']
    %7 = vsyncpa [#allocation4], 0
    %s8 = scalar_lea.sflag [#allocation4], 1
    %9 = vsyncpa %s8, 0
    loop: start=0, step=1, limit=4
    $region2: #{tpu_custom_call.1} parent=1 // loop_pre_header
      _
    $region3: #{tpu_custom_call.1} parent=1 // loop_header
      %s11 = sphi 0, %s15
      %p12 = scmp.ge.s32.totalorder %s11, 4
      %s18 = sphi 0, %s30
      %s19 = sphi 0, %s26
      %s20 = sphi 0, %s18
      %s21 = sphi 0, %s19
      %s22 = sphi 0, %s20
      %s23 = sphi 0, %s21
      %s35 = sphi 0, %s37
      %s38 = sphi 0, %s35
      %s39 = sphi 0, %s38
      %s55 = sphi 0, %s39
      %s61 = sphi 0, %s63
      %s64 = sphi 0, %s61
      %s65 = sphi 0, %s64
      %s81 = sphi 0, %s65
      %s87 = sphi 0, %s89
      %s90 = sphi 0, %s87
      %s91 = sphi 0, %s90
      %s107 = sphi 0, %s91
    $region4: #{tpu_custom_call.1} parent=1 // loop_header_branch
      %14 = sbr.rel (%p12) target = $region8
    $region5: #{tpu_custom_call.1} parent=1 // loop_body
      %s16 = ssub.s32 %s11, 1
      %s17 = ssub.s32 %s11, 2
      %s24 = sadd.s32 1, %s19
      %p25 = scmp.ge.s32.totalorder %s24, 1
      %s26 = scalar_select %p25, 0, %s24
      %s27 = sadd.s32 1, %s18
      %s28 = scalar_select %p25, %s27, %s18
      %p29 = scmp.ge.s32.totalorder %s28, 2
      %s30 = scalar_select %p29, 0, %s28
      %s31 = ssub.s32 %s18, %s30
      %s32 = ssub.s32 %s19, %s26
      %s33 = sor.u32 %s31, %s32
      %p34 = scmp.eq.s32.totalorder %s33, 0
      %s36 = sadd.s32 %s35, 1
      %s37 = scalar_select %p34, %s35, %s36
      %p40 = pneg %p34
      %p41 = scmp.eq.s32.totalorder %s11, 1
      %p42 = por %p40, %p41
      %p43 = scmp.ne.s32.totalorder %s35, %s38
      %p44 = scmp.eq.s32.totalorder %s11, 0
      %p45 = por %p43, %p44
      %p46 = scmp.ne.s32.totalorder %s35, %s38
      %p47 = scmp.eq.s32.totalorder %s16, 1
      %p48 = por %p46, %p47
      %p49 = scmp.ne.s32.totalorder %s38, %s39
      %p50 = scmp.eq.s32.totalorder %s16, 0
      %p51 = por %p49, %p50
      %p52 = scmp.ne.s32.totalorder %s38, %s39
      %p53 = scmp.eq.s32.totalorder %s17, 1
      %p54 = por %p52, %p53
      %p56 = scmp.ne.s32.totalorder %s39, %s55
      %p57 = scmp.eq.s32.totalorder %s17, 0
      %p58 = por %p56, %p57
      %s59 = ssub.s32 %s18, %s30
      %p60 = scmp.eq.s32.totalorder %s59, 0
      %s62 = sadd.s32 %s61, 1
      %s63 = scalar_select %p60, %s61, %s62
      %p66 = pneg %p60
      %p67 = scmp.eq.s32.totalorder %s11, 1
      %p68 = por %p66, %p67
      %p69 = scmp.ne.s32.totalorder %s61, %s64
      %p70 = scmp.eq.s32.totalorder %s11, 0
      %p71 = por %p69, %p70
      %p72 = scmp.ne.s32.totalorder %s61, %s64
      %p73 = scmp.eq.s32.totalorder %s16, 1
      %p74 = por %p72, %p73
      %p75 = scmp.ne.s32.totalorder %s64, %s65
      %p76 = scmp.eq.s32.totalorder %s16, 0
      %p77 = por %p75, %p76
      %p78 = scmp.ne.s32.totalorder %s64, %s65
      %p79 = scmp.eq.s32.totalorder %s17, 1
      %p80 = por %p78, %p79
      %p82 = scmp.ne.s32.totalorder %s65, %s81
      %p83 = scmp.eq.s32.totalorder %s17, 0
      %p84 = por %p82, %p83
      %s85 = ssub.s32 %s18, %s30
      %p86 = scmp.eq.s32.totalorder %s85, 0
      %s88 = sadd.s32 %s87, 1
      %s89 = scalar_select %p86, %s87, %s88
      %p92 = pneg %p86
      %p93 = scmp.eq.s32.totalorder %s11, 1
      %p94 = por %p92, %p93
      %p95 = scmp.ne.s32.totalorder %s87, %s90
      %p96 = scmp.eq.s32.totalorder %s11, 0
      %p97 = por %p95, %p96
      %p98 = scmp.ne.s32.totalorder %s87, %s90
      %p99 = scmp.eq.s32.totalorder %s16, 1
      %p100 = por %p98, %p99
      %p101 = scmp.ne.s32.totalorder %s90, %s91
      %p102 = scmp.eq.s32.totalorder %s16, 0
      %p103 = por %p101, %p102
      %p104 = scmp.ne.s32.totalorder %s90, %s91
      %p105 = scmp.eq.s32.totalorder %s17, 1
      %p106 = por %p104, %p105
      %p108 = scmp.ne.s32.totalorder %s91, %s107
      %p109 = scmp.eq.s32.totalorder %s17, 0
      %p110 = por %p108, %p109
      %p111 = scmp.le.s32.totalorder 1, %s11
      %p112 = scmp.lt.s32.totalorder %s11, 3
      %p113 = pnand %p111, %p112
      %p114 = pneg %p113
      // Predicated region
      $region9: #{tpu_custom_call.1} parent=5 // pred_check
        _
      $region10: #{tpu_custom_call.1} parent=5 // pred_check_branch
        %116 = sbr.rel (%p113) target = $region12
      $region11: #{tpu_custom_call.1} parent=5 // pred_region
        %s117 = ssub.s32 %s11, 1
      $region12: #{tpu_custom_call.1} parent=5 // pred_fallthru
        _
      %p118 = scmp.lt.s32.totalorder %s11, 2
      // Predicated region
      $region13: #{tpu_custom_call.1} parent=5 // pred_check
        %p119 = pneg %p118
      $region14: #{tpu_custom_call.1} parent=5 // pred_check_branch
        %121 = sbr.rel (%p119) target = $region16
      $region15: #{tpu_custom_call.1} parent=5 // pred_region
        // Predicated region
        $region17: #{tpu_custom_call.1} parent=15 // pred_check
          %p122 = pneg %p45
        $region18: #{tpu_custom_call.1} parent=15 // pred_check_branch
          %124 = sbr.rel (%p122) target = $region20
        $region19: #{tpu_custom_call.1} parent=15 // pred_region
          %p125 = scmp.lt.s32.totalorder %s18, 1
          %s126 = scalar_select %p125, %s18, 1
          %p127 = scmp.lt.s32.totalorder %s19, 0
          %s128 = scalar_select %p127, %s19, 0
          %s129 = sadd.s32 %s128, %s126
          %s130 = smul.addr %s129, 8
          %s131 = scalar_lea.vmem %s0, %s130
        $region20: #{tpu_custom_call.1} parent=15 // pred_fallthru
          _
        // Predicated region
        $region21: #{tpu_custom_call.1} parent=15 // pred_check
          %p132 = pneg %p71
        $region22: #{tpu_custom_call.1} parent=15 // pred_check_branch
          %134 = sbr.rel (%p132) target = $region24
        $region23: #{tpu_custom_call.1} parent=15 // pred_region
          %p135 = scmp.lt.s32.totalorder %s18, 1
          %s136 = scalar_select %p135, %s18, 1
          %s137 = smul.addr %s136, 8
          %s138 = scalar_lea.vmem %s1, %s137
        $region24: #{tpu_custom_call.1} parent=15 // pred_fallthru
          _
      $region16: #{tpu_custom_call.1} parent=5 // pred_fallthru
        _
      %p139 = scmp.le.s32.totalorder 1, %s11
      %p140 = scmp.lt.s32.totalorder %s11, 3
      %p141 = pnand %p139, %p140
      %p142 = pneg %p141
      // Predicated region
      $region25: #{tpu_custom_call.1} parent=5 // pred_check
        _
      $region26: #{tpu_custom_call.1} parent=5 // pred_check_branch
        %144 = sbr.rel (%p141) target = $region28
      $region27: #{tpu_custom_call.1} parent=5 // pred_region
        %s145 = ssub.s32 %s11, 1
        %p146 = scmp.lt.s32.totalorder %s20, 1
        %s147 = scalar_select %p146, %s20, 1
        %p148 = scmp.lt.s32.totalorder %s21, 0
        %s149 = scalar_select %p148, %s21, 0
        %s150 = sadd.s32 %s149, %s147
        %s151 = smul.addr %s150, 8
        %s152 = scalar_lea.vmem %s0, %s151
        %p153 = pneg %p51
        %p154 = pneg %p48
        %p155 = scmp.lt.s32.totalorder %s20, 1
        %s156 = scalar_select %p155, %s20, 1
        %s157 = smul.addr %s156, 8
        %s158 = scalar_lea.vmem %s1, %s157
        %p159 = pneg %p77
        %p160 = pneg %p74
        %p161 = pneg %p103
        %p162 = pneg %p100
        %s163 = sand.u32 %s90, 1
        %s164 = scalar_lea.sflag [#allocation4], %s163
        %s165 = sand.u32 %s90, 1
        %s166 = smul.addr %s165, 8
        %s167 = scalar_lea.vmem [#allocation3], %s166
        %p168 = scmp.lt.s32.totalorder %s20, 1
        %s169 = scalar_select %p168, %s20, 1
        %p170 = scmp.lt.s32.totalorder %s21, 0
        %s171 = scalar_select %p170, %s21, 0
        %s172 = sadd.s32 %s171, %s169
        %s173 = smul.addr %s172, 8
        %s174 = scalar_lea.vmem %s0, %s173
        %p175 = scmp.lt.s32.totalorder %s20, 1
        %s176 = scalar_select %p175, %s20, 1
        %s177 = smul.addr %s176, 8
        %s178 = scalar_lea.vmem %s1, %s177
        %p179 = scmp.eq.s32.totalorder %s21, 0
        // Predicated region
        $region29: #{tpu_custom_call.1} parent=27 // pred_check
          %p180 = pneg %p179
        $region30: #{tpu_custom_call.1} parent=27 // pred_check_branch
          %182 = sbr.rel (%p180) target = $region32
        $region31: #{tpu_custom_call.1} parent=27 // pred_region
          %vm183 = vcmask 261120
          %184 = vst.msk [vmem:[#allocation2] sm:$0xff] %vm183, 0.0
        $region32: #{tpu_custom_call.1} parent=27 // pred_fallthru
          _
        %v185 = vld [vmem:[%s174] sm:$0xff]
        %v186 = vld [vmem:[%s178] sm:$0xff]
        %vm187 = vcmp.gt.s32.totalorder %v186, 0
        %s188 = smul.u32 %s21, 32
        %v189 = vstv %s188
        %v190 = vsub.s32 %v186, %v189
        %v191 = vsel %vm187, %v190, 4294967295
        %v192 = vlaneseq
        %v193 = vand.u32 %v192, 127
        %194 = vset.pattern.permute.xlu0 0
        %195 = vperm.xlu0 %194, %v191
        %v196 = vpop.permute.xlu0 %195
        %vm197 = vcmp.eq.s32.totalorder %v193, %v196
        %v198 = vsel %vm197, %v185, 0.0
        %v199 = vld [vmem:[#allocation2] sm:$0xff]
        %v200 = vadd.f32 %v198, 0.0
        %v201 = vadd.f32 %v199, %v200
        %vm202 = vcmask 261120
        %203 = vst.msk [vmem:[#allocation2] sm:$0xff] %vm202, %v201
        // Predicated region
        $region33: #{tpu_custom_call.1} parent=27 // pred_check
          %p204 = pneg %p179
        $region34: #{tpu_custom_call.1} parent=27 // pred_check_branch
          %206 = sbr.rel (%p204) target = $region36
        $region35: #{tpu_custom_call.1} parent=27 // pred_region
          %v207 = vld [vmem:[#allocation2] sm:$0xff]
          %v208 = vsel %vm202, %v207, 0.0
          %209 = vadd.xlane.f32.xlu0 %v208
          %v210 = vpop.xlane.xlu0 %209
          %v211 = vrot.slane %v210, 4
          %v212 = vadd.f32 %v210, %v211
          %v213 = vrot.slane %v212, 2
          %v214 = vadd.f32 %v212, %v213
          %v215 = vrot.slane %v214, 1
          %v216 = vadd.f32 %v214, %v215
          %s217 = vtos %v216
          %v218 = vstv %s217
          %219 = vst [vmem:[%s167] sm:$0xff] %v218
        $region36: #{tpu_custom_call.1} parent=27 // pred_fallthru
          _
        %s220 = sand.u32 %s90, 1
        %s221 = scalar_lea.sflag [#allocation4], %s220
        %s222 = sand.u32 %s90, 1
        %s223 = smul.addr %s222, 8
        %s224 = scalar_lea.vmem [#allocation3], %s223
        // Predicated region
        $region37: #{tpu_custom_call.1} parent=27 // pred_check
          %p225 = pneg %p100
        $region38: #{tpu_custom_call.1} parent=27 // pred_check_branch
          %227 = sbr.rel (%p225) target = $region40
        $region39: #{tpu_custom_call.1} parent=27 // pred_region
          %229 = vsyncadd %s221, 0
          %s230 = smul.addr %s20, 8
          %s231 = scalar_lea.hbm %s2, %s230
          %s233 = sshll.u32 %s224, 4
          %s234 = int_to_ptr.vmem [resolvable:$true] %s233
          %s235 = sshll.u32 %s231, 4
          %s236 = int_to_ptr.hbm [resolvable:$true] %s235
          %238 = dma.vmem_to_hbm [thread:$0]  %s234, 128, %s236, %s221
        $region40: #{tpu_custom_call.1} parent=27 // pred_fallthru
          _
      $region28: #{tpu_custom_call.1} parent=5 // pred_fallthru
        _
      %p239 = scmp.le.s32.totalorder 2, %s11
      // Predicated region
      $region41: #{tpu_custom_call.1} parent=5 // pred_check
        %p240 = pneg %p239
      $region42: #{tpu_custom_call.1} parent=5 // pred_check_branch
        %242 = sbr.rel (%p240) target = $region44
      $region43: #{tpu_custom_call.1} parent=5 // pred_region
        %s243 = ssub.s32 %s11, 2
        // Predicated region
        $region45: #{tpu_custom_call.1} parent=43 // pred_check
          %p244 = pneg %p106
        $region46: #{tpu_custom_call.1} parent=43 // pred_check_branch
          %246 = sbr.rel (%p244) target = $region48
        $region47: #{tpu_custom_call.1} parent=43 // pred_region
          %s247 = sand.u32 %s91, 1
          %s248 = scalar_lea.sflag [#allocation4], %s247
          %s249 = sand.u32 %s91, 1
          %s250 = smul.addr %s249, 8
          %s251 = scalar_lea.vmem [#allocation3], %s250
          %253 = dma.done %s248, 128
        $region48: #{tpu_custom_call.1} parent=43 // pred_fallthru
          _
      $region44: #{tpu_custom_call.1} parent=5 // pred_fallthru
        _
    $region6: #{tpu_custom_call.1} parent=1 // loop_footer
      %s15 = sadd.s32 1, %s11
    $region7: #{tpu_custom_call.1} parent=1 // loop_footer_branch
      %10 = sbr.rel target = $region3
    $region8: #{tpu_custom_call.1} parent=1 // loop_exit
      _
    %254 = vsyncpa [#allocation4], 1
    %s255 = scalar_lea.sflag [#allocation4], 1
    %256 = vsyncpa %s255, 1

</llo_original>
